<compile_context>
chip_gen: v7x
topology: tpu7x:2x2x1
jax: 0.10.0
libtpu: 0.0.40
codegen_flags: <defaults>
</compile_context>

<pallas_src>
import functools

import jax
import jax.numpy as jnp
from jax.experimental import pallas as pl
from jax.experimental.pallas import tpu as pltpu

_LANE = 128                     # lane-axis (last dim) tiling unit
_BF16_SUBLANE = 16              # bf16 packs 16 rows per sublane register
_VMEM_TARGET_BYTES = 40 * 1024 * 1024   # conservative budget (fits v7x 64 MiB/core)


def _round_up(n, m):
    return ((n + m - 1) // m) * m


def _vmem_bytes(tb, d_in, h_p, d_out_p, x_itemsize):
    """Rough VMEM footprint for one grid step (weights single-buffered)."""
    weights = d_in * h_p * 2 + h_p * d_out_p * 2 + (h_p + d_out_p) * 4
    x_tiles = 2 * tb * d_in * x_itemsize          # double-buffered input tile
    out_tiles = 2 * tb * d_out_p * 4              # double-buffered f32 output tile
    temps = tb * d_in * 2 + tb * h_p * (4 + 2) + tb * d_out_p * 4  # x bf16, h f32+bf16, y f32
    return weights + x_tiles + out_tiles + temps


# ----------------------------------------------------------------------------
# Pallas kernel: fused y = relu(x @ W1 + b1) @ W2 + b2 for one batch tile.
# x arrives f32 and is cast to bf16 in-body (MXU fast path); accumulation,
# bias add and ReLU stay in f32 (v5e VPU has no bf16 ALU path).
# ----------------------------------------------------------------------------
def _mlp_head_kernel(x_ref, w1_ref, b1_ref, w2_ref, b2_ref, out_ref):
    x = x_ref[...].astype(jnp.bfloat16)                              # (TB, Din)
    h = jnp.dot(x, w1_ref[...], preferred_element_type=jnp.float32)  # (TB, Hp) f32
    h = jnp.maximum(h + b1_ref[...], 0.0)                            # bias + ReLU (VPU)
    y = jnp.dot(h.astype(jnp.bfloat16), w2_ref[...],
                preferred_element_type=jnp.float32)                  # (TB, Doutp) f32
    out_ref[...] = (y + b2_ref[...]).astype(out_ref.dtype)


@functools.partial(jax.jit, static_argnames=("d_out", "tile_b"))
def mlp_head_forward(x, w1, b1, w2, b2, *, d_out, tile_b=256):
    """Fused MLP head: batch-tiled grid, weights VMEM-resident (single copy).

    Args:
      x:  (batch, d_in) float input, streamed directly (no host-side padding).
      w1: (d_in, h_p)    bf16; h_p is a multiple of 128, padding columns zero.
      b1: (1, h_p)       f32, padding zero.
      w2: (h_p, d_out_p) bf16, lane-padded.
      b2: (1, d_out_p)   f32.
      d_out: logical output width (<= d_out_p); result sliced to it.
      tile_b: max batch tile.  256 is a safe cross-generation default; on v6e
              (128 MiB VMEM) 512 amortizes per-step overhead better when the
              feature dims are modest.
    """
    batch, d_in = x.shape
    d_in_w, h_p = w1.shape
    _, d_out_p = w2.shape
    assert d_in == d_in_w, (d_in, d_in_w)

    # Batch tile: multiple of 16 (bf16 sublane packing), capped at tile_b,
    # shrunk to fit the conservative cross-generation VMEM budget.
    tb = min(tile_b, _round_up(batch, _BF16_SUBLANE))
    tb = max(_BF16_SUBLANE, (tb // _BF16_SUBLANE) * _BF16_SUBLANE)
    while (tb > _BF16_SUBLANE and
           _vmem_bytes(tb, d_in, h_p, d_out_p, x.dtype.itemsize) > _VMEM_TARGET_BYTES):
        tb = max(_BF16_SUBLANE, ((tb // 2) // _BF16_SUBLANE) * _BF16_SUBLANE)

    grid = (pl.cdiv(batch, tb),)   # partial last tile: OOB rows masked on writeback

    needed = _vmem_bytes(tb, d_in, h_p, d_out_p, x.dtype.itemsize)
    vmem_limit = min(max(int(needed * 1.25) + (2 << 20), 16 << 20), 100 << 20)

    flops = 2 * batch * (d_in * h_p + h_p * d_out_p)
    bytes_accessed = (x.size * x.dtype.itemsize + w1.size * 2 + w2.size * 2
                      + b1.size * 4 + b2.size * 4 + batch * d_out_p * 4)

    resident = pl.BlockSpec(memory_space=pltpu.MemorySpace.VMEM)  # whole array, 1 copy

    out = pl.pallas_call(
        _mlp_head_kernel,
        out_shape=jax.ShapeDtypeStruct((batch, d_out_p), jnp.float32),
        grid=grid,
        in_specs=[
            pl.BlockSpec((tb, d_in), lambda i: (i, 0)),   # x: tiled/streamed over batch
            resident,                                     # W1 (single-buffered VMEM)
            resident,                                     # b1
            resident,                                     # W2
            resident,                                     # b2
        ],
        out_specs=pl.BlockSpec((tb, d_out_p), lambda i: (i, 0)),  # lane-dense stores
        compiler_params=pltpu.CompilerParams(
            # batch tiles are independent; only helps when grid >= 2 steps
            # (shards across v7x's two TensorCores, no-op on v5e/v6e).
            dimension_semantics=("parallel",),
            vmem_limit_bytes=vmem_limit,
        ),
        cost_estimate=pl.CostEstimate(
            flops=flops, transcendentals=0, bytes_accessed=bytes_accessed),
    )(x, w1, b1, w2, b2)

    # Column slice back to the logical width (fused under jit); kernel stores
    # stay lane-dense (d_out_p is a multiple of 128).
    return out[:, :d_out]


# ----------------------------------------------------------------------------
# OpenChemModel port (bookkeeping in Python, forward in Pallas)
# ----------------------------------------------------------------------------
class OpenChemModelJAX:
    """JAX/Pallas port of OpenChem's base model.

    __init__ mirrors the PyTorch base class's hyperparameter bookkeeping.
    forward() implements the canonical concrete OpenChem head (2-layer MLP)
    with all compute inside a Pallas TPU kernel.
    """

    @staticmethod
    def get_required_params():
        return {'task': str, 'batch_size': int, 'num_epochs': int,
                'train_data_layer': None, 'val_data_layer': None}

    @staticmethod
    def get_optional_params():
        return {'use_cuda': bool, 'use_clip_grad': bool, 'max_grad_norm': float,
                'random_seed': int, 'print_every': int, 'save_every': int,
                'lr_scheduler': None, 'lr_scheduler_params': dict,
                'eval_metrics': None, 'logdir': str}

    def __init__(self, params, in_features, hidden_size, out_features):
        self.params = params
        self.use_cuda = params.get('use_cuda', False)
        self.batch_size = params['batch_size']
        self.eval_metrics = params.get('eval_metrics', None)
        self.task = params['task']
        self.logdir = params.get('logdir', '')
        self.world_size = params.get('world_size', 1)
        self.num_epochs = params['num_epochs']
        self.use_clip_grad = params.get('use_clip_grad', False)
        self.max_grad_norm = params.get('max_grad_norm') if self.use_clip_grad else None
        self.random_seed = params.get('random_seed', 0)
        self.print_every = params.get('print_every', 1)
        self.save_every = params.get('save_every', 1)

        self.in_features = in_features
        self.hidden_size = hidden_size
        self.out_features = out_features

        # Only the matmul OUTPUT dims are lane-padded (multiple of 128); the
        # K dim of W1 stays at the logical in_features so x streams unpadded.
        self.h_p = _round_up(hidden_size, _LANE)
        self.d_out_p = _round_up(out_features, _LANE)

        # Deterministic synthetic parameter init (nn.Linear-like uniform
        # fan-in scaling), seeded from random_seed.  Weights stored bf16
        # (MXU fast path, half the DMA bytes), biases f32, padded with zeros
        # (zero hidden padding -> relu(0)=0 -> padding contributes nothing).
        key = jax.random.PRNGKey(self.random_seed)
        k1, k2, k3, k4 = jax.random.split(key, 4)
        s1 = 1.0 / jnp.sqrt(in_features)
        s2 = 1.0 / jnp.sqrt(hidden_size)
        w1 = jax.random.uniform(k1, (in_features, hidden_size), jnp.float32, -s1, s1)
        b1 = jax.random.uniform(k2, (hidden_size,), jnp.float32, -s1, s1)
        w2 = jax.random.uniform(k3, (hidden_size, out_features), jnp.float32, -s2, s2)
        b2 = jax.random.uniform(k4, (out_features,), jnp.float32, -s2, s2)

        self.w1 = jnp.zeros((in_features, self.h_p), jnp.bfloat16
                            ).at[:, :hidden_size].set(w1.astype(jnp.bfloat16))
        self.b1 = jnp.zeros((1, self.h_p), jnp.float32).at[0, :hidden_size].set(b1)
        self.w2 = jnp.zeros((self.h_p, self.d_out_p), jnp.bfloat16
                            ).at[:hidden_size, :out_features].set(w2.astype(jnp.bfloat16))
        self.b2 = jnp.zeros((1, self.d_out_p), jnp.float32).at[0, :out_features].set(b2)

    def forward(self, inp, eval=False):
        # eval flag only toggles dropout/BN in OpenChem subclasses; no-op here.
        return mlp_head_forward(inp, self.w1, self.b1, self.w2, self.b2,
                                d_out=self.out_features)

    def cast_inputs(self, sample):
        return jnp.asarray(sample, dtype=jnp.float32)


# ----------------------------------------------------------------------------
# Reference (plain JAX) for verification — same bf16-matmul / f32-accumulate
# numerics as the kernel, computed on the same (lane-padded) parameters.
# ----------------------------------------------------------------------------
def _ref_forward(x, w1, b1, w2, b2, d_out):
    h = jnp.dot(x.astype(jnp.bfloat16), w1, preferred_element_type=jnp.float32) + b1
    h = jnp.maximum(h, 0.0)
    y = jnp.dot(h.astype(jnp.bfloat16), w2, preferred_element_type=jnp.float32) + b2
    return y[:, :d_out]


if __name__ == "__main__":
    params = {
        'task': 'regression',
        'batch_size': 8,
        'num_epochs': 1,
        'train_data_layer': None,
        'val_data_layer': None,
        'use_cuda': False,
        'use_clip_grad': False,
        'random_seed': 0,
        'print_every': 1,
        'save_every': 1,
        'logdir': '/tmp/openchem',
        'world_size': 1,
        'eval_metrics': None,
    }

    batch, in_features, hidden_size, out_features = 8, 32, 64, 16
    model = OpenChemModelJAX(params, in_features, hidden_size, out_features)

    key = jax.random.PRNGKey(0)
    k_a, k_b = jax.random.split(key)
    x = jax.random.normal(k_a, (batch, in_features), dtype=jnp.float32)
    x = model.cast_inputs(x)

    y = jax.block_until_ready(model.forward(x, eval=True))
    y_ref = _ref_forward(x, model.w1, model.b1, model.w2, model.b2, out_features)
    assert y.shape == (batch, out_features), y.shape
    assert jnp.allclose(y, y_ref, atol=1e-2, rtol=1e-2), "mismatch vs reference (case 1)"

    # Case 2: multi-step grid with a partial last batch tile (batch % tb != 0)
    # to exercise the masked-writeback path.
    x2 = model.cast_inputs(jax.random.normal(k_b, (37, in_features), dtype=jnp.float32))
    y2 = jax.block_until_ready(
        mlp_head_forward(x2, model.w1, model.b1, model.w2, model.b2,
                         d_out=out_features, tile_b=16))
    y2_ref = _ref_forward(x2, model.w1, model.b1, model.w2, model.b2, out_features)
    assert y2.shape == (37, out_features), y2.shape
    assert jnp.allclose(y2, y2_ref, atol=1e-2, rtol=1e-2), "mismatch vs reference (case 2)"

    print("KERNEL_OK")
</pallas_src>

<mosaic_0001>
module attributes {stable_mosaic.version = 11 : i64} {
  func.func @_mlp_head_kernel(%arg0: i32, %arg1: memref<16x32xf32, #tpu.memory_space<vmem>>, %arg2: memref<32x128xbf16, #tpu.memory_space<vmem>>, %arg3: memref<1x128xf32, #tpu.memory_space<vmem>>, %arg4: memref<128x128xbf16, #tpu.memory_space<vmem>>, %arg5: memref<1x128xf32, #tpu.memory_space<vmem>>, %arg6: memref<16x128xf32, #tpu.memory_space<vmem>>) attributes {dimension_semantics = [#tpu.dimension_semantics<parallel>], iteration_bounds = array<i64: 1>, scalar_prefetch = 0 : i64, scratch_operands = 0 : i64, tpu.core_type = #tpu.core_type<tc>, window_params = [{transform_indices = @transform_0, window_bounds = array<i64: 16, 32>}, {pipeline_mode = #tpu.pipeline_mode<synchronous>, transform_indices = @transform_1, window_bounds = array<i64: 32, 128>}, {pipeline_mode = #tpu.pipeline_mode<synchronous>, transform_indices = @transform_2, window_bounds = array<i64: 1, 128>}, {pipeline_mode = #tpu.pipeline_mode<synchronous>, transform_indices = @transform_3, window_bounds = array<i64: 128, 128>}, {pipeline_mode = #tpu.pipeline_mode<synchronous>, transform_indices = @transform_4, window_bounds = array<i64: 1, 128>}, {transform_indices = @transform_5, window_bounds = array<i64: 16, 128>}]} {
    %c0 = arith.constant 0 : index
    %c0_0 = arith.constant 0 : index
    %0 = vector.load %arg1[%c0, %c0_0] : memref<16x32xf32, #tpu.memory_space<vmem>>, vector<16x32xf32>
    %1 = arith.truncf %0 : vector<16x32xf32> to vector<16x32xbf16>
    %c0_1 = arith.constant 0 : index
    %c0_2 = arith.constant 0 : index
    %2 = vector.load %arg2[%c0_1, %c0_2] : memref<32x128xbf16, #tpu.memory_space<vmem>>, vector<32x128xbf16>
    %cst = arith.constant dense<0.000000e+00> : vector<16x128xf32>
    %3 = tpu.matmul %1, %2, %cst {dimension_numbers = #tpu.dot_dimension_numbers<[1], [0], [0], [1], [0, 0, 1, 1], [], []>} : vector<16x32xbf16>, vector<32x128xbf16>, vector<16x128xf32> -> vector<16x128xf32>
    %c0_3 = arith.constant 0 : index
    %c0_4 = arith.constant 0 : index
    %4 = vector.load %arg3[%c0_3, %c0_4] : memref<1x128xf32, #tpu.memory_space<vmem>>, vector<1x128xf32>
    %5 = vector.broadcast %4 : vector<1x128xf32> to vector<16x128xf32>
    %6 = arith.addf %3, %5 : vector<16x128xf32>
    %cst_5 = arith.constant 0.000000e+00 : f32
    %7 = vector.broadcast %cst_5 : f32 to vector<16x128xf32>
    %8 = arith.maximumf %6, %7 : vector<16x128xf32>
    %9 = arith.truncf %8 : vector<16x128xf32> to vector<16x128xbf16>
    %c0_6 = arith.constant 0 : index
    %c0_7 = arith.constant 0 : index
    %10 = vector.load %arg4[%c0_6, %c0_7] : memref<128x128xbf16, #tpu.memory_space<vmem>>, vector<128x128xbf16>
    %cst_8 = arith.constant dense<0.000000e+00> : vector<16x128xf32>
    %11 = tpu.matmul %9, %10, %cst_8 {dimension_numbers = #tpu.dot_dimension_numbers<[1], [0], [0], [1], [0, 0, 1, 1], [], []>} : vector<16x128xbf16>, vector<128x128xbf16>, vector<16x128xf32> -> vector<16x128xf32>
    %c0_9 = arith.constant 0 : index
    %c0_10 = arith.constant 0 : index
    %12 = vector.load %arg5[%c0_9, %c0_10] : memref<1x128xf32, #tpu.memory_space<vmem>>, vector<1x128xf32>
    %13 = vector.broadcast %12 : vector<1x128xf32> to vector<16x128xf32>
    %14 = arith.addf %11, %13 : vector<16x128xf32>
    %c0_11 = arith.constant 0 : index
    %c0_12 = arith.constant 0 : index
    %15 = vector.load %arg6[%c0_11, %c0_12] : memref<16x128xf32, #tpu.memory_space<vmem>>, vector<16x128xf32>
    tpu.vector_store %arg6[%c0_11, %c0_12], %14 {strides = array<i32>} : memref<16x128xf32, #tpu.memory_space<vmem>>, vector<16x128xf32>,
    return
  }
  func.func @transform_0(%arg0: i32) -> (i32, i32) {
    %c0_i32 = arith.constant 0 : i32
    %c0_i32_0 = arith.constant 0 : i32
    return %arg0, %c0_i32 : i32, i32
  }
  func.func @transform_1(%arg0: i32) -> (i32, i32) {
    %c0_i32 = arith.constant 0 : i32
    %c0_i32_0 = arith.constant 0 : i32
    %c0_i32_1 = arith.constant 0 : i32
    return %c0_i32, %c0_i32_0 : i32, i32
  }
  func.func @transform_2(%arg0: i32) -> (i32, i32) {
    %c0_i32 = arith.constant 0 : i32
    %c0_i32_0 = arith.constant 0 : i32
    %c0_i32_1 = arith.constant 0 : i32
    return %c0_i32, %c0_i32_0 : i32, i32
  }
  func.func @transform_3(%arg0: i32) -> (i32, i32) {
    %c0_i32 = arith.constant 0 : i32
    %c0_i32_0 = arith.constant 0 : i32
    %c0_i32_1 = arith.constant 0 : i32
    return %c0_i32, %c0_i32_0 : i32, i32
  }
  func.func @transform_4(%arg0: i32) -> (i32, i32) {
    %c0_i32 = arith.constant 0 : i32
    %c0_i32_0 = arith.constant 0 : i32
    %c0_i32_1 = arith.constant 0 : i32
    return %c0_i32, %c0_i32_0 : i32, i32
  }
  func.func @transform_5(%arg0: i32) -> (i32, i32) {
    %c0_i32 = arith.constant 0 : i32
    %c0_i32_0 = arith.constant 0 : i32
    return %arg0, %c0_i32 : i32, i32
  }
}

</mosaic_0001>

<llo_original>
// kernel: mlp_head_forward.1
$region0: #{mlp_head_forward.1}
  #allocation0 [shape = 'u32[]', space=smem, size = 0x4, offset = 0x4, fixed_abs, tag = 'smem constant byte address 0x4 - core index']
  #allocation1 [shape = 'u32[144,128]{1,0:T(1,128)}', space=vmem, size = 0x12000, scoped, tag = 'internal scratch']
  %s0 = inlined_call_operand.hbm [shape: f32[8,32], index: 0, kind: input, shape index: {}]
  %s1 = inlined_call_operand.hbm [shape: bf16[32,128], index: 1, kind: input, shape index: {}]
  %s2 = inlined_call_operand.vmem [shape: f32[1,128], index: 2, kind: input, shape index: {}]
  %s3 = inlined_call_operand.hbm [shape: bf16[128,128], index: 3, kind: input, shape index: {}]
  %s4 = inlined_call_operand.vmem [shape: f32[1,128], index: 4, kind: input, shape index: {}]
  %s5 = inlined_call_operand.hbm [shape: f32[8,128], index: 5, kind: output, shape index: {}]
  %s6 = sld [smem:[#allocation0]]
  $region42: #{mlp_head_forward.1} parent=0
    _
  %s8 = ssub.s32 1, %s6
  %s9 = scalar_select 0, %s8, %s6
  $region1: #{mlp_head_forward.1} parent=0
    #allocation2 [shape = 'u8[8192]{0}', space=vmem, size = 0x2000, scoped, tag = 'input window, operand 0, single buffered']
    #allocation3 [shape = 's32[1]{0}', space=sflag, size = 0x4, scoped, tag = 'scoped memory for mlp_head_forward.1']
    #allocation4 [shape = 's32[1]{0}', space=sflag, size = 0x4, scoped, tag = 'scoped memory for mlp_head_forward.1']
    #allocation5 [shape = 'u8[8192]{0}', space=vmem, size = 0x2000, scoped, tag = 'input window, operand 1, single buffered']
    #allocation6 [shape = 's32[1]{0}', space=sflag, size = 0x4, scoped, tag = 'scoped memory for mlp_head_forward.1']
    #allocation7 [shape = 'u8[32768]{0}', space=vmem, size = 0x8000, scoped, tag = 'input window, operand 3, single buffered']
    #allocation8 [shape = 'u8[8192]{0}', space=vmem, size = 0x2000, scoped, tag = 'output window, operand 0, single buffered']
    %10 = vsyncpa [#allocation3], 0
    %11 = vsyncpa [#allocation6], 0
    %12 = vsyncpa [#allocation4], 0
    // Predicated region
    $region2: #{mlp_head_forward.1} parent=1 // pred_check
      _
    $region3: #{mlp_head_forward.1} parent=1 // pred_check_branch
      %14 = sbr.rel (0) target = $region5
    $region4: #{mlp_head_forward.1} parent=1 // pred_region
      %s16 = ssub.s32 256, 128
      %17 = vsyncadd [#allocation3], %s16
      %s18 = sshll.u32 [#allocation2], 4
      %s19 = int_to_ptr.vmem [resolvable:$true] %s18
      %24 = dma.hbm_to_vmem [thread:$0]  %s0, 128, %s19, [#allocation3], 128, 128, 8
    $region5: #{mlp_head_forward.1} parent=1 // pred_fallthru
      _
    // Predicated region
    $region6: #{mlp_head_forward.1} parent=1 // pred_check
      _
    $region7: #{mlp_head_forward.1} parent=1 // pred_check_branch
      %26 = sbr.rel (0) target = $region9
    $region8: #{mlp_head_forward.1} parent=1 // pred_region
      %s28 = ssub.s32 256, 256
      %29 = vsyncadd [#allocation6], %s28
      %s30 = sshll.u32 [#allocation5], 4
      %s31 = int_to_ptr.vmem [resolvable:$true] %s30
      %36 = dma.hbm_to_vmem [thread:$0]  %s1, 256, %s31, [#allocation6], 64, 64, 4
    $region9: #{mlp_head_forward.1} parent=1 // pred_fallthru
      _
    // Predicated region
    $region10: #{mlp_head_forward.1} parent=1 // pred_check
      _
    $region11: #{mlp_head_forward.1} parent=1 // pred_check_branch
      %38 = sbr.rel (0) target = $region13
    $region12: #{mlp_head_forward.1} parent=1 // pred_region
      _
    $region13: #{mlp_head_forward.1} parent=1 // pred_fallthru
      _
    // Predicated region
    $region14: #{mlp_head_forward.1} parent=1 // pred_check
      _
    $region15: #{mlp_head_forward.1} parent=1 // pred_check_branch
      %40 = sbr.rel (0) target = $region17
    $region16: #{mlp_head_forward.1} parent=1 // pred_region
      %s42 = ssub.s32 1024, 1024
      %43 = vsyncadd [#allocation6], %s42
      %s44 = sshll.u32 [#allocation7], 4
      %s45 = int_to_ptr.vmem [resolvable:$true] %s44
      %50 = dma.hbm_to_vmem [thread:$0]  %s3, 1024, %s45, [#allocation6], 64, 64, 4
    $region17: #{mlp_head_forward.1} parent=1 // pred_fallthru
      _
    // Predicated region
    $region18: #{mlp_head_forward.1} parent=1 // pred_check
      _
    $region19: #{mlp_head_forward.1} parent=1 // pred_check_branch
      %52 = sbr.rel (0) target = $region21
    $region20: #{mlp_head_forward.1} parent=1 // pred_region
      _
    $region21: #{mlp_head_forward.1} parent=1 // pred_fallthru
      _
    // Predicated region
    $region22: #{mlp_head_forward.1} parent=1 // pred_check
      _
    $region23: #{mlp_head_forward.1} parent=1 // pred_check_branch
      %54 = sbr.rel (0) target = $region25
    $region24: #{mlp_head_forward.1} parent=1 // pred_region
      %55 = dma.done [#allocation3], 256
    $region25: #{mlp_head_forward.1} parent=1 // pred_fallthru
      _
    // Predicated region
    $region26: #{mlp_head_forward.1} parent=1 // pred_check
      _
    $region27: #{mlp_head_forward.1} parent=1 // pred_check_branch
      %57 = sbr.rel (0) target = $region29
    $region28: #{mlp_head_forward.1} parent=1 // pred_region
      %58 = dma.done [#allocation6], 256
    $region29: #{mlp_head_forward.1} parent=1 // pred_fallthru
      _
    // Predicated region
    $region30: #{mlp_head_forward.1} parent=1 // pred_check
      _
    $region31: #{mlp_head_forward.1} parent=1 // pred_check_branch
      %60 = sbr.rel (0) target = $region33
    $region32: #{mlp_head_forward.1} parent=1 // pred_region
      %61 = dma.done [#allocation6], 1024
    $region33: #{mlp_head_forward.1} parent=1 // pred_fallthru
      _
    %v63 = vld [vmem:[#allocation2] sm:$0xff]
    %v64 = vld [vmem:[#allocation2 + $0x8] sm:$0xff]
    %v65 = vpack.c.bf16 %v64, %v63
    %v66 = vld [vmem:[#allocation5] sm:$0xf]
    %v67 = vld [vmem:[#allocation5 + $0x4] sm:$0xf]
    %v68 = vld [vmem:[#allocation5 + $0x8] sm:$0xf]
    %v69 = vld [vmem:[#allocation5 + $0xc] sm:$0xf]
    %v70 = vld [vmem:[%s2] sm:$0x1]
    %v72 = vlaneseq
    %v73 = vshrl.u32 %v72, 7
    %v74 = vsub.s32 0, %v73
    %v75 = vrot.slane %v70, %v74
    %v81 = vunpack.c.l.b16 %v66
    %v82 = vunpack.c.l.b16 %v67
    %v83 = vunpack.c.l.b16 %v68
    %v84 = vunpack.c.l.b16 %v69
    %v85 = vpack.c.b16 %v82, %v81
    %v86 = vpack.c.b16 %v84, %v83
    %vm89 = vcmask 261120
    %v91 = vsel %vm89, %v65, 0
    %93 = vmatprep.subr.bf16.mxu0 0
    %94 = vmatpush1.bf16.msra.mxu0 %v85
    %95 = vmatprep.subr.bf16.mxu0 0
    %96 = vmatpush1.bf16.msra.mxu0 %v86
    %97 = vmatprep.subr.bf16.mxu0 0
    %98 = vmatpush1.bf16.msra.mxu0 0
    %99 = vmatprep.subr.bf16.mxu0 0
    %100 = vmatpush1.bf16.msra.mxu0 0
    %101 = vmatprep.subr.bf16.mxu0 0
    %102 = vmatpush1.bf16.msra.mxu0 0
    %103 = vmatprep.subr.bf16.mxu0 0
    %104 = vmatpush1.bf16.msra.mxu0 0
    %105 = vmatprep.subr.bf16.mxu0 0
    %106 = vmatpush1.bf16.msra.mxu0 0
    %107 = vmatprep.subr.bf16.mxu0 0
    %108 = vmatpush1.bf16.msra.mxu0 0
    %109 = vmatprep.subr.bf16.mxu0 0
    %110 = vmatpush1.bf16.msra.mxu0 0
    %111 = vmatprep.subr.bf16.mxu0 0
    %112 = vmatpush1.bf16.msra.mxu0 0
    %113 = vmatprep.subr.bf16.mxu0 0
    %114 = vmatpush1.bf16.msra.mxu0 0
    %115 = vmatprep.subr.bf16.mxu0 0
    %116 = vmatpush1.bf16.msra.mxu0 0
    %117 = vmatprep.subr.bf16.mxu0 0
    %118 = vmatpush1.bf16.msra.mxu0 0
    %119 = vmatprep.subr.bf16.mxu0 0
    %120 = vmatpush1.bf16.msra.mxu0 0
    %121 = vmatprep.subr.bf16.mxu0 0
    %122 = vmatpush1.bf16.msra.mxu0 0
    %123 = vmatprep.subr.bf16.mxu0 0
    %124 = vmatpush1.bf16.msra.mxu0 0
    %125 = vmatprep.mubr.bf16.mxu0 0
    %126 = vmatmul.mubr.bf16.gmra.mrb[0].mxu0 %v91
    %v127 = vpop.f32.mrb[0].mxu0
    %v128 = vadd.f32 %v75, %v127
    %v129 = vpop.f32.mrb[0].mxu0
    %v130 = vpop.f32.mrb[0].mxu0
    %v131 = vadd.f32 %v75, %v130
    %v132 = vpop.f32.mrb[0].mxu0
    %133 = vdwg.mxu0
    %v134 = vmax.f32 %v128, 0.0
    %v135 = vmax.f32 %v131, 0.0
    %v136 = vpack.c.bf16 %v135, %v134
    %v137 = vld [vmem:[#allocation7] sm:$0xf]
    %v138 = vld [vmem:[#allocation7 + $0x4] sm:$0xf]
    %v139 = vld [vmem:[#allocation7 + $0x8] sm:$0xf]
    %v140 = vld [vmem:[#allocation7 + $0xc] sm:$0xf]
    %v141 = vld [vmem:[#allocation7 + $0x10] sm:$0xf]
    %v142 = vld [vmem:[#allocation7 + $0x14] sm:$0xf]
    %v143 = vld [vmem:[#allocation7 + $0x18] sm:$0xf]
    %v144 = vld [vmem:[#allocation7 + $0x1c] sm:$0xf]
    %v145 = vld [vmem:[#allocation7 + $0x20] sm:$0xf]
    %v146 = vld [vmem:[#allocation7 + $0x24] sm:$0xf]
    %v147 = vld [vmem:[#allocation7 + $0x28] sm:$0xf]
    %v148 = vld [vmem:[#allocation7 + $0x2c] sm:$0xf]
    %v149 = vld [vmem:[#allocation7 + $0x30] sm:$0xf]
    %v150 = vld [vmem:[#allocation7 + $0x34] sm:$0xf]
    %v151 = vld [vmem:[#allocation7 + $0x38] sm:$0xf]
    %v152 = vld [vmem:[#allocation7 + $0x3c] sm:$0xf]
    %v153 = vld [vmem:[%s4] sm:$0x1]
    %v155 = vlaneseq
    %v156 = vshrl.u32 %v155, 7
    %v157 = vsub.s32 0, %v156
    %v158 = vrot.slane %v153, %v157
    %v176 = vunpack.c.l.b16 %v137
    %v177 = vunpack.c.l.b16 %v138
    %v178 = vunpack.c.l.b16 %v139
    %v179 = vunpack.c.l.b16 %v140
    %v180 = vunpack.c.l.b16 %v141
    %v181 = vunpack.c.l.b16 %v142
    %v182 = vunpack.c.l.b16 %v143
    %v183 = vunpack.c.l.b16 %v144
    %v184 = vunpack.c.l.b16 %v145
    %v185 = vunpack.c.l.b16 %v146
    %v186 = vunpack.c.l.b16 %v147
    %v187 = vunpack.c.l.b16 %v148
    %v188 = vunpack.c.l.b16 %v149
    %v189 = vunpack.c.l.b16 %v150
    %v190 = vunpack.c.l.b16 %v151
    %v191 = vunpack.c.l.b16 %v152
    %v192 = vpack.c.b16 %v177, %v176
    %v193 = vpack.c.b16 %v179, %v178
    %v194 = vpack.c.b16 %v181, %v180
    %v195 = vpack.c.b16 %v183, %v182
    %v196 = vpack.c.b16 %v185, %v184
    %v197 = vpack.c.b16 %v187, %v186
    %v198 = vpack.c.b16 %v189, %v188
    %v199 = vpack.c.b16 %v191, %v190
    %208 = vmatprep.subr.bf16.mxu0 0
    %209 = vmatpush1.bf16.msra.mxu0 %v192
    %210 = vmatprep.subr.bf16.mxu0 0
    %211 = vmatpush1.bf16.msra.mxu0 %v193
    %212 = vmatprep.subr.bf16.mxu0 0
    %213 = vmatpush1.bf16.msra.mxu0 %v194
    %214 = vmatprep.subr.bf16.mxu0 0
    %215 = vmatpush1.bf16.msra.mxu0 %v195
    %216 = vmatprep.subr.bf16.mxu0 0
    %217 = vmatpush1.bf16.msra.mxu0 %v196
    %218 = vmatprep.subr.bf16.mxu0 0
    %219 = vmatpush1.bf16.msra.mxu0 %v197
    %220 = vmatprep.subr.bf16.mxu0 0
    %221 = vmatpush1.bf16.msra.mxu0 %v198
    %222 = vmatprep.subr.bf16.mxu0 0
    %223 = vmatpush1.bf16.msra.mxu0 %v199
    %224 = vmatprep.subr.bf16.mxu0 0
    %225 = vmatpush1.bf16.msra.mxu0 0
    %226 = vmatprep.subr.bf16.mxu0 0
    %227 = vmatpush1.bf16.msra.mxu0 0
    %228 = vmatprep.subr.bf16.mxu0 0
    %229 = vmatpush1.bf16.msra.mxu0 0
    %230 = vmatprep.subr.bf16.mxu0 0
    %231 = vmatpush1.bf16.msra.mxu0 0
    %232 = vmatprep.subr.bf16.mxu0 0
    %233 = vmatpush1.bf16.msra.mxu0 0
    %234 = vmatprep.subr.bf16.mxu0 0
    %235 = vmatpush1.bf16.msra.mxu0 0
    %236 = vmatprep.subr.bf16.mxu0 0
    %237 = vmatpush1.bf16.msra.mxu0 0
    %238 = vmatprep.subr.bf16.mxu0 0
    %239 = vmatpush1.bf16.msra.mxu0 0
    %240 = vmatprep.mubr.bf16.mxu0 0
    %241 = vmatmul.mubr.bf16.gmra.mrb[0].mxu0 %v136
    %v242 = vpop.f32.mrb[0].mxu0
    %v243 = vadd.f32 %v158, %v242
    %v244 = vpop.f32.mrb[0].mxu0
    %v245 = vpop.f32.mrb[0].mxu0
    %v246 = vadd.f32 %v158, %v245
    %v247 = vpop.f32.mrb[0].mxu0
    %248 = vdwg.mxu0
    %249 = vst [vmem:[#allocation8] sm:$0xff] %v243
    %250 = vst [vmem:[#allocation8 + $0x8] sm:$0xff] %v246
    // Predicated region
    $region34: #{mlp_head_forward.1} parent=1 // pred_check
      _
    $region35: #{mlp_head_forward.1} parent=1 // pred_check_branch
      %252 = sbr.rel (0) target = $region37
    $region36: #{mlp_head_forward.1} parent=1 // pred_region
      %s254 = ssub.s32 256, 128
      %255 = vsyncadd [#allocation4], %s254
      %s256 = sshll.u32 [#allocation8], 4
      %s257 = int_to_ptr.vmem [resolvable:$true] %s256
      %262 = dma.vmem_to_hbm [thread:$0]  %s257, 128, %s5, [#allocation4], 128, 128, 8
    $region37: #{mlp_head_forward.1} parent=1 // pred_fallthru
      _
    // Predicated region
    $region38: #{mlp_head_forward.1} parent=1 // pred_check
      _
    $region39: #{mlp_head_forward.1} parent=1 // pred_check_branch
      %264 = sbr.rel (0) target = $region41
    $region40: #{mlp_head_forward.1} parent=1 // pred_region
      %265 = dma.done [#allocation4], 256
    $region41: #{mlp_head_forward.1} parent=1 // pred_fallthru
      _
    %266 = vsyncpa [#allocation3], 1
    %267 = vsyncpa [#allocation6], 1
    %268 = vsyncpa [#allocation4], 1

</llo_original>
